<compile_context>
chip_gen: v6e
topology: v6e:2x2x1
jax: 0.10.0
libtpu: 0.0.40
codegen_flags: <defaults>
</compile_context>

<pallas_src>
import jax
import jax.numpy as jnp
from jax.experimental import pallas as pl
from jax.experimental.pallas import tpu as pltpu


def _round_up(n, m):
    return ((n + m - 1) // m) * m


def actor_kernel(x_ref,
                 wa_ref, ba_ref,
                 w1_ref, b1_ref,
                 w2_ref, b2_ref,
                 w3_ref, b3_ref,
                 probs_ref, attn_ref):
    f32 = jnp.float32
    bf16 = jnp.bfloat16

    x = x_ref[...]                                          # (TB, S) f32
    xb = x.astype(bf16)                                     # MXU operand

    # attention gate: sigmoid(attn1(state)); bf16 MXU, f32 accumulate
    z = jnp.dot(xb, wa_ref[...], preferred_element_type=f32) + ba_ref[...]
    attn = 1.0 / (1.0 + jnp.exp(-z))                        # f32, exact

    # gated state (f32 mul), then bf16 for the MXU
    xg = (x * attn).astype(bf16)

    # linear1 + relu
    h1 = jnp.dot(xg, w1_ref[...], preferred_element_type=f32) + b1_ref[...]
    h1 = jnp.maximum(h1, 0.0).astype(bf16)

    # linear2 + relu
    h2 = jnp.dot(h1, w2_ref[...], preferred_element_type=f32) + b2_ref[...]
    h2 = jnp.maximum(h2, 0.0).astype(bf16)

    # linear3 -> logits (true action width, no padded columns to mask)
    logits = jnp.dot(h2, w3_ref[...], preferred_element_type=f32) + b3_ref[...]

    # numerically stable softmax with an exact divide so rows sum to 1
    m = jnp.max(logits, axis=-1, keepdims=True)
    e = jnp.exp(logits - m)
    probs = e / jnp.sum(e, axis=-1, keepdims=True)

    probs_ref[...] = probs.astype(probs_ref.dtype)
    attn_ref[...] = attn.astype(attn_ref.dtype)


def actor_forward(x, params, tb=2048):
    """x: (B, state_size) float32.  params: bf16 weights (in,out), f32 biases (1,out)."""
    p = params
    B, S = x.shape
    A = p["w3"].shape[1]

    # Batch tile: multiple of 8 sublanes, capped at `tb`; pad batch only.
    TB = min(_round_up(tb, 8), _round_up(B, 8))
    B_pad = _round_up(B, TB)
    grid = (B_pad // TB,)

    if B_pad != B:
        x_in = jnp.zeros((B_pad, S), jnp.float32).at[:B].set(x.astype(jnp.float32))
    else:
        x_in = x.astype(jnp.float32)

    def batch_spec(cols):
        # minor dim equals the full array dim -> legal even when < 128 lanes
        return pl.BlockSpec((TB, cols), lambda i: (i, 0))

    def const_spec(arr):
        # same block every grid step -> loaded once, stays VMEM-resident
        return pl.BlockSpec(arr.shape, lambda i: (0, 0))

    probs_pad, attn_pad = pl.pallas_call(
        actor_kernel,
        out_shape=(
            jax.ShapeDtypeStruct((B_pad, A), jnp.float32),
            jax.ShapeDtypeStruct((B_pad, S), jnp.float32),
        ),
        grid=grid,
        in_specs=[
            batch_spec(S),
            const_spec(p["wa"]), const_spec(p["ba"]),
            const_spec(p["w1"]), const_spec(p["b1"]),
            const_spec(p["w2"]), const_spec(p["b2"]),
            const_spec(p["w3"]), const_spec(p["b3"]),
        ],
        out_specs=(batch_spec(A), batch_spec(S)),
        compiler_params=pltpu.CompilerParams(
            dimension_semantics=("parallel",)),
    )(x_in,
      p["wa"], p["ba"],
      p["w1"], p["b1"],
      p["w2"], p["b2"],
      p["w3"], p["b3"])

    if B_pad != B:
        return probs_pad[:B], attn_pad[:B]
    return probs_pad, attn_pad


def init_params(key, state_size, action_size):
    """Deterministic synthetic init. Weights (in, out) stored bf16, biases f32."""
    ks = jax.random.split(key, 8)

    def w(k, i, o):
        return (jax.random.normal(k, (i, o), jnp.float32) * 0.1).astype(jnp.bfloat16)

    def b(k, o):
        return jax.random.normal(k, (1, o), jnp.float32) * 0.1

    return {
        "wa": w(ks[0], state_size, state_size), "ba": b(ks[1], state_size),
        "w1": w(ks[2], state_size, 128),        "b1": b(ks[3], 128),
        "w2": w(ks[4], 128, 256),               "b2": b(ks[5], 256),
        "w3": w(ks[6], 256, action_size),       "b3": b(ks[7], action_size),
    }


def actor_forward_ref(x, p):
    """Pure-JAX reference mirroring the kernel's dtype flow (bf16 MXU operands,
    f32 accumulation), so results match to float32 rounding."""
    f32 = jnp.float32
    bf16 = jnp.bfloat16
    xb = x.astype(bf16)
    z = jnp.dot(xb, p["wa"], preferred_element_type=f32) + p["ba"]
    attn = 1.0 / (1.0 + jnp.exp(-z))
    xg = (x * attn).astype(bf16)
    h1 = jnp.maximum(jnp.dot(xg, p["w1"], preferred_element_type=f32) + p["b1"], 0.0).astype(bf16)
    h2 = jnp.maximum(jnp.dot(h1, p["w2"], preferred_element_type=f32) + p["b2"], 0.0).astype(bf16)
    logits = jnp.dot(h2, p["w3"], preferred_element_type=f32) + p["b3"]
    return jax.nn.softmax(logits, axis=-1), attn


if __name__ == "__main__":
    key = jax.random.PRNGKey(0)
    k_x, k_x2, k_p = jax.random.split(key, 3)

    B, STATE_SIZE, ACTION_SIZE = 2, 16, 8
    params = init_params(k_p, STATE_SIZE, ACTION_SIZE)

    # Small-batch check (B=2).
    x = jax.random.normal(k_x, (B, STATE_SIZE), jnp.float32)
    probs, attn = actor_forward(x, params)
    jax.block_until_ready((probs, attn))

    probs_ref, attn_ref = actor_forward_ref(x, params)
    assert probs.shape == (B, ACTION_SIZE) and attn.shape == (B, STATE_SIZE)
    assert jnp.allclose(attn, attn_ref, atol=1e-4, rtol=1e-4)
    assert jnp.allclose(probs, probs_ref, atol=1e-4, rtol=1e-4)
    assert jnp.allclose(jnp.sum(probs, axis=-1), 1.0, atol=1e-5)

    # Multi-step-grid check (exercises batch tiling with resident weights).
    B2 = 300
    x2 = jax.random.normal(k_x2, (B2, STATE_SIZE), jnp.float32)
    probs2, attn2 = actor_forward(x2, params, tb=128)
    jax.block_until_ready((probs2, attn2))
    probs2_ref, attn2_ref = actor_forward_ref(x2, params)
    assert probs2.shape == (B2, ACTION_SIZE) and attn2.shape == (B2, STATE_SIZE)
    assert jnp.allclose(attn2, attn2_ref, atol=1e-4, rtol=1e-4)
    assert jnp.allclose(probs2, probs2_ref, atol=1e-4, rtol=1e-4)
    assert jnp.allclose(jnp.sum(probs2, axis=-1), 1.0, atol=1e-5)

    print("KERNEL_OK")
</pallas_src>

<mosaic_0001>
module attributes {stable_mosaic.version = 11 : i64} {
  func.func @actor_kernel(%arg0: i32, %arg1: memref<8x16xf32, #tpu.memory_space<vmem>>, %arg2: memref<16x16xbf16, #tpu.memory_space<vmem>>, %arg3: memref<1x16xf32, #tpu.memory_space<vmem>>, %arg4: memref<16x128xbf16, #tpu.memory_space<vmem>>, %arg5: memref<1x128xf32, #tpu.memory_space<vmem>>, %arg6: memref<128x256xbf16, #tpu.memory_space<vmem>>, %arg7: memref<1x256xf32, #tpu.memory_space<vmem>>, %arg8: memref<256x8xbf16, #tpu.memory_space<vmem>>, %arg9: memref<1x8xf32, #tpu.memory_space<vmem>>, %arg10: memref<8x8xf32, #tpu.memory_space<vmem>>, %arg11: memref<8x16xf32, #tpu.memory_space<vmem>>) attributes {dimension_semantics = [#tpu.dimension_semantics<parallel>], iteration_bounds = array<i64: 1>, scalar_prefetch = 0 : i64, scratch_operands = 0 : i64, tpu.core_type = #tpu.core_type<tc>, window_params = [{transform_indices = @transform_0, window_bounds = array<i64: 8, 16>}, {pipeline_mode = #tpu.pipeline_mode<synchronous>, transform_indices = @transform_1, window_bounds = array<i64: 16, 16>}, {pipeline_mode = #tpu.pipeline_mode<synchronous>, transform_indices = @transform_2, window_bounds = array<i64: 1, 16>}, {pipeline_mode = #tpu.pipeline_mode<synchronous>, transform_indices = @transform_3, window_bounds = array<i64: 16, 128>}, {pipeline_mode = #tpu.pipeline_mode<synchronous>, transform_indices = @transform_4, window_bounds = array<i64: 1, 128>}, {pipeline_mode = #tpu.pipeline_mode<synchronous>, transform_indices = @transform_5, window_bounds = array<i64: 128, 256>}, {pipeline_mode = #tpu.pipeline_mode<synchronous>, transform_indices = @transform_6, window_bounds = array<i64: 1, 256>}, {pipeline_mode = #tpu.pipeline_mode<synchronous>, transform_indices = @transform_7, window_bounds = array<i64: 256, 8>}, {pipeline_mode = #tpu.pipeline_mode<synchronous>, transform_indices = @transform_8, window_bounds = array<i64: 1, 8>}, {transform_indices = @transform_9, window_bounds = array<i64: 8, 8>}, {transform_indices = @transform_10, window_bounds = array<i64: 8, 16>}]} {
    %c0 = arith.constant 0 : index
    %c0_0 = arith.constant 0 : index
    %0 = vector.load %arg1[%c0, %c0_0] : memref<8x16xf32, #tpu.memory_space<vmem>>, vector<8x16xf32>
    %1 = arith.truncf %0 : vector<8x16xf32> to vector<8x16xbf16>
    %c0_1 = arith.constant 0 : index
    %c0_2 = arith.constant 0 : index
    %2 = vector.load %arg2[%c0_1, %c0_2] : memref<16x16xbf16, #tpu.memory_space<vmem>>, vector<16x16xbf16>
    %cst = arith.constant dense<0.000000e+00> : vector<8x16xf32>
    %3 = tpu.matmul %1, %2, %cst {dimension_numbers = #tpu.dot_dimension_numbers<[1], [0], [0], [1], [0, 0, 1, 1], [], []>} : vector<8x16xbf16>, vector<16x16xbf16>, vector<8x16xf32> -> vector<8x16xf32>
    %c0_3 = arith.constant 0 : index
    %c0_4 = arith.constant 0 : index
    %4 = vector.load %arg3[%c0_3, %c0_4] : memref<1x16xf32, #tpu.memory_space<vmem>>, vector<1x16xf32>
    %5 = vector.broadcast %4 : vector<1x16xf32> to vector<8x16xf32>
    %6 = arith.addf %3, %5 : vector<8x16xf32>
    %cst_5 = arith.constant 0.000000e+00 : f32
    %7 = vector.broadcast %cst_5 : f32 to vector<8x16xf32>
    %8 = arith.subf %7, %6 : vector<8x16xf32>
    %9 = math.exp %8 : vector<8x16xf32>
    %cst_6 = arith.constant 1.000000e+00 : f32
    %10 = vector.broadcast %cst_6 : f32 to vector<8x16xf32>
    %11 = arith.addf %10, %9 : vector<8x16xf32>
    %cst_7 = arith.constant 1.000000e+00 : f32
    %12 = vector.broadcast %cst_7 : f32 to vector<8x16xf32>
    %13 = arith.divf %12, %11 : vector<8x16xf32>
    %14 = arith.mulf %0, %13 : vector<8x16xf32>
    %15 = arith.truncf %14 : vector<8x16xf32> to vector<8x16xbf16>
    %c0_8 = arith.constant 0 : index
    %c0_9 = arith.constant 0 : index
    %16 = vector.load %arg4[%c0_8, %c0_9] : memref<16x128xbf16, #tpu.memory_space<vmem>>, vector<16x128xbf16>
    %cst_10 = arith.constant dense<0.000000e+00> : vector<8x128xf32>
    %17 = tpu.matmul %15, %16, %cst_10 {dimension_numbers = #tpu.dot_dimension_numbers<[1], [0], [0], [1], [0, 0, 1, 1], [], []>} : vector<8x16xbf16>, vector<16x128xbf16>, vector<8x128xf32> -> vector<8x128xf32>
    %c0_11 = arith.constant 0 : index
    %c0_12 = arith.constant 0 : index
    %18 = vector.load %arg5[%c0_11, %c0_12] : memref<1x128xf32, #tpu.memory_space<vmem>>, vector<1x128xf32>
    %19 = vector.broadcast %18 : vector<1x128xf32> to vector<8x128xf32>
    %20 = arith.addf %17, %19 : vector<8x128xf32>
    %cst_13 = arith.constant 0.000000e+00 : f32
    %21 = vector.broadcast %cst_13 : f32 to vector<8x128xf32>
    %22 = arith.maximumf %20, %21 : vector<8x128xf32>
    %23 = arith.truncf %22 : vector<8x128xf32> to vector<8x128xbf16>
    %c0_14 = arith.constant 0 : index
    %c0_15 = arith.constant 0 : index
    %24 = vector.load %arg6[%c0_14, %c0_15] : memref<128x256xbf16, #tpu.memory_space<vmem>>, vector<128x256xbf16>
    %cst_16 = arith.constant dense<0.000000e+00> : vector<8x256xf32>
    %25 = tpu.matmul %23, %24, %cst_16 {dimension_numbers = #tpu.dot_dimension_numbers<[1], [0], [0], [1], [0, 0, 1, 1], [], []>} : vector<8x128xbf16>, vector<128x256xbf16>, vector<8x256xf32> -> vector<8x256xf32>
    %c0_17 = arith.constant 0 : index
    %c0_18 = arith.constant 0 : index
    %26 = vector.load %arg7[%c0_17, %c0_18] : memref<1x256xf32, #tpu.memory_space<vmem>>, vector<1x256xf32>
    %27 = vector.broadcast %26 : vector<1x256xf32> to vector<8x256xf32>
    %28 = arith.addf %25, %27 : vector<8x256xf32>
    %cst_19 = arith.constant 0.000000e+00 : f32
    %29 = vector.broadcast %cst_19 : f32 to vector<8x256xf32>
    %30 = arith.maximumf %28, %29 : vector<8x256xf32>
    %31 = arith.truncf %30 : vector<8x256xf32> to vector<8x256xbf16>
    %c0_20 = arith.constant 0 : index
    %c0_21 = arith.constant 0 : index
    %32 = vector.load %arg8[%c0_20, %c0_21] : memref<256x8xbf16, #tpu.memory_space<vmem>>, vector<256x8xbf16>
    %cst_22 = arith.constant dense<0.000000e+00> : vector<8x8xf32>
    %33 = tpu.matmul %31, %32, %cst_22 {dimension_numbers = #tpu.dot_dimension_numbers<[1], [0], [0], [1], [0, 0, 1, 1], [], []>} : vector<8x256xbf16>, vector<256x8xbf16>, vector<8x8xf32> -> vector<8x8xf32>
    %c0_23 = arith.constant 0 : index
    %c0_24 = arith.constant 0 : index
    %34 = vector.load %arg9[%c0_23, %c0_24] : memref<1x8xf32, #tpu.memory_space<vmem>>, vector<1x8xf32>
    %35 = vector.broadcast %34 : vector<1x8xf32> to vector<8x8xf32>
    %36 = arith.addf %33, %35 : vector<8x8xf32>
    %cst_25 = arith.constant dense<0xFF800000> : vector<8xf32>
    %37 = vector.multi_reduction <maximumf>, %36, %cst_25 [1] : vector<8x8xf32> to vector<8xf32>
    %38 = vector.shape_cast %37 : vector<8xf32> to vector<8x1xf32>
    %39 = vector.broadcast %38 : vector<8x1xf32> to vector<8x8xf32>
    %40 = arith.subf %36, %39 : vector<8x8xf32>
    %41 = math.exp %40 : vector<8x8xf32>
    %cst_26 = arith.constant dense<0.000000e+00> : vector<8xf32>
    %42 = vector.multi_reduction <add>, %41, %cst_26 [1] : vector<8x8xf32> to vector<8xf32>
    %43 = vector.shape_cast %42 : vector<8xf32> to vector<8x1xf32>
    %44 = vector.broadcast %43 : vector<8x1xf32> to vector<8x8xf32>
    %45 = arith.divf %41, %44 : vector<8x8xf32>
    %c0_27 = arith.constant 0 : index
    %c0_28 = arith.constant 0 : index
    %46 = vector.load %arg10[%c0_27, %c0_28] : memref<8x8xf32, #tpu.memory_space<vmem>>, vector<8x8xf32>
    tpu.vector_store %arg10[%c0_27, %c0_28], %45 {strides = array<i32>} : memref<8x8xf32, #tpu.memory_space<vmem>>, vector<8x8xf32>,
    %c0_29 = arith.constant 0 : index
    %c0_30 = arith.constant 0 : index
    %47 = vector.load %arg11[%c0_29, %c0_30] : memref<8x16xf32, #tpu.memory_space<vmem>>, vector<8x16xf32>
    tpu.vector_store %arg11[%c0_29, %c0_30], %13 {strides = array<i32>} : memref<8x16xf32, #tpu.memory_space<vmem>>, vector<8x16xf32>,
    return
  }
  func.func @transform_0(%arg0: i32) -> (i32, i32) {
    %c0_i32 = arith.constant 0 : i32
    %c0_i32_0 = arith.constant 0 : i32
    return %arg0, %c0_i32 : i32, i32
  }
  func.func @transform_1(%arg0: i32) -> (i32, i32) {
    %c0_i32 = arith.constant 0 : i32
    %c0_i32_0 = arith.constant 0 : i32
    %c0_i32_1 = arith.constant 0 : i32
    return %c0_i32, %c0_i32_0 : i32, i32
  }
  func.func @transform_2(%arg0: i32) -> (i32, i32) {
    %c0_i32 = arith.constant 0 : i32
    %c0_i32_0 = arith.constant 0 : i32
    %c0_i32_1 = arith.constant 0 : i32
    return %c0_i32, %c0_i32_0 : i32, i32
  }
  func.func @transform_3(%arg0: i32) -> (i32, i32) {
    %c0_i32 = arith.constant 0 : i32
    %c0_i32_0 = arith.constant 0 : i32
    %c0_i32_1 = arith.constant 0 : i32
    return %c0_i32, %c0_i32_0 : i32, i32
  }
  func.func @transform_4(%arg0: i32) -> (i32, i32) {
    %c0_i32 = arith.constant 0 : i32
    %c0_i32_0 = arith.constant 0 : i32
    %c0_i32_1 = arith.constant 0 : i32
    return %c0_i32, %c0_i32_0 : i32, i32
  }
  func.func @transform_5(%arg0: i32) -> (i32, i32) {
    %c0_i32 = arith.constant 0 : i32
    %c0_i32_0 = arith.constant 0 : i32
    %c0_i32_1 = arith.constant 0 : i32
    return %c0_i32, %c0_i32_0 : i32, i32
  }
  func.func @transform_6(%arg0: i32) -> (i32, i32) {
    %c0_i32 = arith.constant 0 : i32
    %c0_i32_0 = arith.constant 0 : i32
    %c0_i32_1 = arith.constant 0 : i32
    return %c0_i32, %c0_i32_0 : i32, i32
  }
  func.func @transform_7(%arg0: i32) -> (i32, i32) {
    %c0_i32 = arith.constant 0 : i32
    %c0_i32_0 = arith.constant 0 : i32
    %c0_i32_1 = arith.constant 0 : i32
    return %c0_i32, %c0_i32_0 : i32, i32
  }
  func.func @transform_8(%arg0: i32) -> (i32, i32) {
    %c0_i32 = arith.constant 0 : i32
    %c0_i32_0 = arith.constant 0 : i32
    %c0_i32_1 = arith.constant 0 : i32
    return %c0_i32, %c0_i32_0 : i32, i32
  }
  func.func @transform_9(%arg0: i32) -> (i32, i32) {
    %c0_i32 = arith.constant 0 : i32
    %c0_i32_0 = arith.constant 0 : i32
    return %arg0, %c0_i32 : i32, i32
  }
  func.func @transform_10(%arg0: i32) -> (i32, i32) {
    %c0_i32 = arith.constant 0 : i32
    %c0_i32_0 = arith.constant 0 : i32
    return %arg0, %c0_i32 : i32, i32
  }
}

</mosaic_0001>

<llo_original>
// kernel: tpu_custom_call.1
$region0: #{tpu_custom_call.1}
  #allocation0 [shape = 'u32[]', space=smem, size = 0x4, offset = 0x4, fixed_abs, tag = 'smem constant byte address 0x4 - core index']
  #allocation1 [shape = 'u32[144,128]{1,0:T(1,128)}', space=vmem, size = 0x12000, scoped, tag = 'internal scratch']
  %s0 = inlined_call_operand.vmem [shape: f32[8,16], index: 0, kind: input, shape index: {}]
  %s1 = inlined_call_operand.hbm [shape: bf16[16,16], index: 1, kind: input, shape index: {}]
  %s2 = inlined_call_operand.vmem [shape: f32[1,16], index: 2, kind: input, shape index: {}]
  %s3 = inlined_call_operand.hbm [shape: bf16[16,128], index: 3, kind: input, shape index: {}]
  %s4 = inlined_call_operand.vmem [shape: f32[1,128], index: 4, kind: input, shape index: {}]
  %s5 = inlined_call_operand.vmem [shape: bf16[128,256], index: 5, kind: input, shape index: {}]
  %s6 = inlined_call_operand.vmem [shape: f32[1,256], index: 6, kind: input, shape index: {}]
  %s7 = inlined_call_operand.vmem [shape: bf16[256,8], index: 7, kind: input, shape index: {}]
  %s8 = inlined_call_operand.vmem [shape: f32[1,8], index: 8, kind: input, shape index: {}]
  %s9 = inlined_call_operand.hbm [shape: f32[8,8], index: 9, kind: output, shape index: {0}]
  %s10 = inlined_call_operand.hbm [shape: f32[8,16], index: 10, kind: output, shape index: {1}]
  %11 = xla_tuple %s9, %s10
  %s12 = sld [smem:[#allocation0]]
  $region62: #{tpu_custom_call.1} parent=0
    _
  %s14 = ssub.s32 1, %s12
  %s15 = scalar_select 0, %s14, %s12
  $region1: #{tpu_custom_call.1} parent=0
    #allocation2 [shape = 'u8[4096]{0}', space=vmem, size = 0x1000, scoped, tag = 'input window, operand 1, single buffered']
    #allocation3 [shape = 's32[1]{0}', space=sflag, size = 0x4, scoped, tag = 'scoped memory for tpu_custom_call.1']
    #allocation4 [shape = 's32[1]{0}', space=sflag, size = 0x4, scoped, tag = 'scoped memory for tpu_custom_call.1']
    #allocation5 [shape = 'u8[4096]{0}', space=vmem, size = 0x1000, scoped, tag = 'input window, operand 3, single buffered']
    #allocation6 [shape = 's32[1]{0}', space=sflag, size = 0x4, scoped, tag = 'scoped memory for tpu_custom_call.1']
    #allocation7 [shape = 'u8[4096]{0}', space=vmem, size = 0x1000, scoped, tag = 'output window, operand 0, single buffered']
    #allocation8 [shape = 'u8[4096]{0}', space=vmem, size = 0x1000, scoped, tag = 'output window, operand 1, single buffered']
    #allocation9 [shape = 's32[1]{0}', space=sflag, size = 0x4, scoped, tag = 'scoped memory for tpu_custom_call.1']
    %16 = vsyncpa [#allocation3], 0
    %17 = vsyncpa [#allocation6], 0
    %18 = vsyncpa [#allocation4], 0
    %19 = vsyncpa [#allocation9], 0
    // Predicated region
    $region2: #{tpu_custom_call.1} parent=1 // pred_check
      _
    $region3: #{tpu_custom_call.1} parent=1 // pred_check_branch
      %21 = sbr.rel (0) target = $region5
    $region4: #{tpu_custom_call.1} parent=1 // pred_region
      _
    $region5: #{tpu_custom_call.1} parent=1 // pred_fallthru
      _
    // Predicated region
    $region6: #{tpu_custom_call.1} parent=1 // pred_check
      _
    $region7: #{tpu_custom_call.1} parent=1 // pred_check_branch
      %23 = sbr.rel (0) target = $region9
    $region8: #{tpu_custom_call.1} parent=1 // pred_region
      %s25 = ssub.s32 128, 128
      %26 = vsyncadd [#allocation3], %s25
      %s27 = sshll.u32 [#allocation2], 4
      %s28 = int_to_ptr.vmem [resolvable:$true] %s27
      %33 = dma.hbm_to_vmem [thread:$0]  %s1, 128, %s28, [#allocation3], 64, 64, 4
    $region9: #{tpu_custom_call.1} parent=1 // pred_fallthru
      _
    // Predicated region
    $region10: #{tpu_custom_call.1} parent=1 // pred_check
      _
    $region11: #{tpu_custom_call.1} parent=1 // pred_check_branch
      %35 = sbr.rel (0) target = $region13
    $region12: #{tpu_custom_call.1} parent=1 // pred_region
      _
    $region13: #{tpu_custom_call.1} parent=1 // pred_fallthru
      _
    // Predicated region
    $region14: #{tpu_custom_call.1} parent=1 // pred_check
      _
    $region15: #{tpu_custom_call.1} parent=1 // pred_check_branch
      %37 = sbr.rel (0) target = $region17
    $region16: #{tpu_custom_call.1} parent=1 // pred_region
      %s39 = ssub.s32 128, 128
      %40 = vsyncadd [#allocation6], %s39
      %s41 = sshll.u32 [#allocation5], 4
      %s42 = int_to_ptr.vmem [resolvable:$true] %s41
      %47 = dma.hbm_to_vmem [thread:$0]  %s3, 128, %s42, [#allocation6], 64, 64, 4
    $region17: #{tpu_custom_call.1} parent=1 // pred_fallthru
      _
    // Predicated region
    $region18: #{tpu_custom_call.1} parent=1 // pred_check
      _
    $region19: #{tpu_custom_call.1} parent=1 // pred_check_branch
      %49 = sbr.rel (0) target = $region21
    $region20: #{tpu_custom_call.1} parent=1 // pred_region
      _
    $region21: #{tpu_custom_call.1} parent=1 // pred_fallthru
      _
    // Predicated region
    $region22: #{tpu_custom_call.1} parent=1 // pred_check
      _
    $region23: #{tpu_custom_call.1} parent=1 // pred_check_branch
      %51 = sbr.rel (0) target = $region25
    $region24: #{tpu_custom_call.1} parent=1 // pred_region
      _
    $region25: #{tpu_custom_call.1} parent=1 // pred_fallthru
      _
    // Predicated region
    $region26: #{tpu_custom_call.1} parent=1 // pred_check
      _
    $region27: #{tpu_custom_call.1} parent=1 // pred_check_branch
      %53 = sbr.rel (0) target = $region29
    $region28: #{tpu_custom_call.1} parent=1 // pred_region
      _
    $region29: #{tpu_custom_call.1} parent=1 // pred_fallthru
      _
    // Predicated region
    $region30: #{tpu_custom_call.1} parent=1 // pred_check
      _
    $region31: #{tpu_custom_call.1} parent=1 // pred_check_branch
      %55 = sbr.rel (0) target = $region33
    $region32: #{tpu_custom_call.1} parent=1 // pred_region
      _
    $region33: #{tpu_custom_call.1} parent=1 // pred_fallthru
      _
    // Predicated region
    $region34: #{tpu_custom_call.1} parent=1 // pred_check
      _
    $region35: #{tpu_custom_call.1} parent=1 // pred_check_branch
      %57 = sbr.rel (0) target = $region37
    $region36: #{tpu_custom_call.1} parent=1 // pred_region
      _
    $region37: #{tpu_custom_call.1} parent=1 // pred_fallthru
      _
    // Predicated region
    $region38: #{tpu_custom_call.1} parent=1 // pred_check
      _
    $region39: #{tpu_custom_call.1} parent=1 // pred_check_branch
      %59 = sbr.rel (0) target = $region41
    $region40: #{tpu_custom_call.1} parent=1 // pred_region
      %60 = dma.done [#allocation3], 128
    $region41: #{tpu_custom_call.1} parent=1 // pred_fallthru
      _
    // Predicated region
    $region42: #{tpu_custom_call.1} parent=1 // pred_check
      _
    $region43: #{tpu_custom_call.1} parent=1 // pred_check_branch
      %62 = sbr.rel (0) target = $region45
    $region44: #{tpu_custom_call.1} parent=1 // pred_region
      %63 = dma.done [#allocation6], 128
    $region45: #{tpu_custom_call.1} parent=1 // pred_fallthru
      _
    %v65 = vld [vmem:[%s0] sm:$0xff]
    %v66 = vpack.c.bf16 %v65, %v65
    %v67 = vld [vmem:[#allocation2] sm:$0xf]
    %v68 = vld [vmem:[#allocation2 + $0x4] sm:$0xf]
    %v69 = vld [vmem:[%s2] sm:$0x1]
    %v71 = vlaneseq
    %v72 = vshrl.u32 %v71, 7
    %v73 = vsub.s32 0, %v72
    %v74 = vrot.slane %v69, %v73
    %v78 = vunpack.c.l.b16 %v67
    %v79 = vunpack.c.l.b16 %v68
    %v80 = vpack.c.b16 %v79, %v78
    %vm82 = vcmask 130048
    %v84 = vsel %vm82, %v66, 0
    %86 = vmatprep.subr.bf16.mxu0 0
    %87 = vmatpush1.bf16.msra.mxu0 0
    %88 = vmatprep.subr.bf16.mxu0 0
    %89 = vmatpush1.bf16.msra.mxu0 0
    %90 = vmatprep.subr.bf16.mxu0 0
    %91 = vmatpush1.bf16.msra.mxu0 0
    %92 = vmatprep.subr.bf16.mxu0 0
    %93 = vmatpush1.bf16.msra.mxu0 0
    %94 = vmatprep.subr.bf16.mxu0 0
    %95 = vmatpush1.bf16.msra.mxu0 0
    %96 = vmatprep.subr.bf16.mxu0 0
    %97 = vmatpush1.bf16.msra.mxu0 0
    %98 = vmatprep.subr.bf16.mxu0 0
    %99 = vmatpush1.bf16.msra.mxu0 0
    %100 = vmatprep.subr.bf16.mxu0 0
    %101 = vmatpush1.bf16.msra.mxu0 %v80
    %102 = vmatprep.subr.bf16.mxu0 0
    %103 = vmatpush2.bf16.msra.mxu0 0
    %104 = vmatprep.subr.bf16.mxu0 0
    %105 = vmatpush2.bf16.msra.mxu0 0
    %106 = vmatprep.subr.bf16.mxu0 0
    %107 = vmatpush2.bf16.msra.mxu0 0
    %108 = vmatprep.subr.bf16.mxu0 0
    %109 = vmatpush2.bf16.msra.mxu0 0
    %110 = vmatprep.subr.bf16.mxu0 0
    %111 = vmatpush2.bf16.msra.mxu0 0
    %112 = vmatprep.subr.bf16.mxu0 0
    %113 = vmatpush2.bf16.msra.mxu0 0
    %114 = vmatprep.subr.bf16.mxu0 0
    %115 = vmatpush2.bf16.msra.mxu0 0
    %116 = vmatprep.subr.bf16.mxu0 0
    %117 = vmatpush2.bf16.msra.mxu0 0
    %118 = vmatprep.mubr.bf16.mxu0 0
    %119 = vmatmul.mubr.bf16.gmra.mxu0 %v84
    %v120 = vpop.f32.mrf.mxu0
    %v121 = vadd.f32 %v74, %v120
    %v122 = vpop.f32.mrf.mxu0
    %v123 = vpop.f32.mrf.mxu0
    %v124 = vpop.f32.mrf.mxu0
    %125 = vdwg.mxu0
    %v126 = vsub.f32 0.0, %v121
    %v127 = vmul.f32 %v126, 1.442695
    %v128 = vpow.pop %v127
    %v129 = vadd.f32 %v128, 1.0
    %v130 = vrcp.pop %v129
    %v131 = vmul.f32 1.0, %v130
    %v132 = vmul.f32 %v65, %v131
    %v133 = vpack.c.bf16 %v132, %v132
    %v134 = vld [vmem:[#allocation5] sm:$0xf]
    %v135 = vld [vmem:[#allocation5 + $0x4] sm:$0xf]
    %v136 = vld [vmem:[%s4] sm:$0x1]
    %v138 = vlaneseq
    %v139 = vshrl.u32 %v138, 7
    %v140 = vsub.s32 0, %v139
    %v141 = vrot.slane %v136, %v140
    %v145 = vunpack.c.l.b16 %v134
    %v146 = vunpack.c.l.b16 %v135
    %v147 = vpack.c.b16 %v146, %v145
    %v150 = vsel %vm82, %v133, 0
    %152 = vmatprep.subr.bf16.mxu0 0
    %153 = vmatpush1.bf16.msra.mxu0 0
    %154 = vmatprep.subr.bf16.mxu0 0
    %155 = vmatpush1.bf16.msra.mxu0 0
    %156 = vmatprep.subr.bf16.mxu0 0
    %157 = vmatpush1.bf16.msra.mxu0 0
    %158 = vmatprep.subr.bf16.mxu0 0
    %159 = vmatpush1.bf16.msra.mxu0 0
    %160 = vmatprep.subr.bf16.mxu0 0
    %161 = vmatpush1.bf16.msra.mxu0 0
    %162 = vmatprep.subr.bf16.mxu0 0
    %163 = vmatpush1.bf16.msra.mxu0 0
    %164 = vmatprep.subr.bf16.mxu0 0
    %165 = vmatpush1.bf16.msra.mxu0 0
    %166 = vmatprep.subr.bf16.mxu0 0
    %167 = vmatpush1.bf16.msra.mxu0 %v147
    %168 = vmatprep.subr.bf16.mxu0 0
    %169 = vmatpush2.bf16.msra.mxu0 0
    %170 = vmatprep.subr.bf16.mxu0 0
    %171 = vmatpush2.bf16.msra.mxu0 0
    %172 = vmatprep.subr.bf16.mxu0 0
    %173 = vmatpush2.bf16.msra.mxu0 0
    %174 = vmatprep.subr.bf16.mxu0 0
    %175 = vmatpush2.bf16.msra.mxu0 0
    %176 = vmatprep.subr.bf16.mxu0 0
    %177 = vmatpush2.bf16.msra.mxu0 0
    %178 = vmatprep.subr.bf16.mxu0 0
    %179 = vmatpush2.bf16.msra.mxu0 0
    %180 = vmatprep.subr.bf16.mxu0 0
    %181 = vmatpush2.bf16.msra.mxu0 0
    %182 = vmatprep.subr.bf16.mxu0 0
    %183 = vmatpush2.bf16.msra.mxu0 0
    %184 = vmatprep.mubr.bf16.mxu0 0
    %185 = vmatmul.mubr.bf16.gmra.mxu0 %v150
    %v186 = vpop.f32.mrf.mxu0
    %v187 = vadd.f32 %v141, %v186
    %v188 = vpop.f32.mrf.mxu0
    %v189 = vpop.f32.mrf.mxu0
    %v190 = vpop.f32.mrf.mxu0
    %191 = vdwg.mxu0
    %v192 = vmax.f32 %v187, 0.0
    %v193 = vpack.c.bf16 %v192, %v192
    %v194 = vld [vmem:[%s5] sm:$0xff]
    %v195 = vld [vmem:[%s5 + $0x8] sm:$0xff]
    %v196 = vld [vmem:[%s5 + $0x10] sm:$0xff]
    %v197 = vld [vmem:[%s5 + $0x18] sm:$0xff]
    %v198 = vld [vmem:[%s5 + $0x20] sm:$0xff]
    %v199 = vld [vmem:[%s5 + $0x28] sm:$0xff]
    %v200 = vld [vmem:[%s5 + $0x30] sm:$0xff]
    %v201 = vld [vmem:[%s5 + $0x38] sm:$0xff]
    %v202 = vld [vmem:[%s5 + $0x40] sm:$0xff]
    %v203 = vld [vmem:[%s5 + $0x48] sm:$0xff]
    %v204 = vld [vmem:[%s5 + $0x50] sm:$0xff]
    %v205 = vld [vmem:[%s5 + $0x58] sm:$0xff]
    %v206 = vld [vmem:[%s5 + $0x60] sm:$0xff]
    %v207 = vld [vmem:[%s5 + $0x68] sm:$0xff]
    %v208 = vld [vmem:[%s5 + $0x70] sm:$0xff]
    %v209 = vld [vmem:[%s5 + $0x78] sm:$0xff]
    %v210 = vld [vmem:[%s6] sm:$0x3]
    %v212 = vlaneseq
    %v213 = vshrl.u32 %v212, 7
    %v214 = vsub.s32 0, %v213
    %v215 = vrot.slane %v210, %v214
    %v216 = vlaneseq
    %v217 = vshrl.u32 %v216, 7
    %v218 = vsub.s32 1, %v217
    %v219 = vrot.slane %v210, %v218
    %v238 = vunpack.c.l.b16 %v194
    %v239 = vunpack.c.h.b16 %v194
    %v240 = vunpack.c.l.b16 %v195
    %v241 = vunpack.c.h.b16 %v195
    %v242 = vunpack.c.l.b16 %v196
    %v243 = vunpack.c.h.b16 %v196
    %v244 = vunpack.c.l.b16 %v197
    %v245 = vunpack.c.h.b16 %v197
    %v246 = vunpack.c.l.b16 %v198
    %v247 = vunpack.c.h.b16 %v198
    %v248 = vunpack.c.l.b16 %v199
    %v249 = vunpack.c.h.b16 %v199
    %v250 = vunpack.c.l.b16 %v200
    %v251 = vunpack.c.h.b16 %v200
    %v252 = vunpack.c.l.b16 %v201
    %v253 = vunpack.c.h.b16 %v201
    %v254 = vunpack.c.l.b16 %v202
    %v255 = vunpack.c.h.b16 %v202
    %v256 = vunpack.c.l.b16 %v203
    %v257 = vunpack.c.h.b16 %v203
    %v258 = vunpack.c.l.b16 %v204
    %v259 = vunpack.c.h.b16 %v204
    %v260 = vunpack.c.l.b16 %v205
    %v261 = vunpack.c.h.b16 %v205
    %v262 = vunpack.c.l.b16 %v206
    %v263 = vunpack.c.h.b16 %v206
    %v264 = vunpack.c.l.b16 %v207
    %v265 = vunpack.c.h.b16 %v207
    %v266 = vunpack.c.l.b16 %v208
    %v267 = vunpack.c.h.b16 %v208
    %v268 = vunpack.c.l.b16 %v209
    %v269 = vunpack.c.h.b16 %v209
    %v270 = vpack.c.b16 %v240, %v238
    %v271 = vpack.c.b16 %v241, %v239
    %v272 = vpack.c.b16 %v244, %v242
    %v273 = vpack.c.b16 %v245, %v243
    %v274 = vpack.c.b16 %v248, %v246
    %v275 = vpack.c.b16 %v249, %v247
    %v276 = vpack.c.b16 %v252, %v250
    %v277 = vpack.c.b16 %v253, %v251
    %v278 = vpack.c.b16 %v256, %v254
    %v279 = vpack.c.b16 %v257, %v255
    %v280 = vpack.c.b16 %v260, %v258
    %v281 = vpack.c.b16 %v261, %v259
    %v282 = vpack.c.b16 %v264, %v262
    %v283 = vpack.c.b16 %v265, %v263
    %v284 = vpack.c.b16 %v268, %v266
    %v285 = vpack.c.b16 %v269, %v267
    %302 = vmatprep.subr.bf16.mxu0 %v285
    %303 = vmatpush1.bf16.msra.mxu0 %v284
    %304 = vmatprep.subr.bf16.mxu0 %v283
    %305 = vmatpush1.bf16.msra.mxu0 %v282
    %306 = vmatprep.subr.bf16.mxu0 %v281
    %307 = vmatpush1.bf16.msra.mxu0 %v280
    %308 = vmatprep.subr.bf16.mxu0 %v279
    %309 = vmatpush1.bf16.msra.mxu0 %v278
    %310 = vmatprep.subr.bf16.mxu0 %v277
    %311 = vmatpush1.bf16.msra.mxu0 %v276
    %312 = vmatprep.subr.bf16.mxu0 %v275
    %313 = vmatpush1.bf16.msra.mxu0 %v274
    %314 = vmatprep.subr.bf16.mxu0 %v273
    %315 = vmatpush1.bf16.msra.mxu0 %v272
    %316 = vmatprep.subr.bf16.mxu0 %v271
    %317 = vmatpush1.bf16.msra.mxu0 %v270
    %318 = vmatprep.subr.bf16.mxu0 0
    %319 = vmatpush2.bf16.msra.mxu0 0
    %320 = vmatprep.subr.bf16.mxu0 0
    %321 = vmatpush2.bf16.msra.mxu0 0
    %322 = vmatprep.subr.bf16.mxu0 0
    %323 = vmatpush2.bf16.msra.mxu0 0
    %324 = vmatprep.subr.bf16.mxu0 0
    %325 = vmatpush2.bf16.msra.mxu0 0
    %326 = vmatprep.subr.bf16.mxu0 0
    %327 = vmatpush2.bf16.msra.mxu0 0
    %328 = vmatprep.subr.bf16.mxu0 0
    %329 = vmatpush2.bf16.msra.mxu0 0
    %330 = vmatprep.subr.bf16.mxu0 0
    %331 = vmatpush2.bf16.msra.mxu0 0
    %332 = vmatprep.subr.bf16.mxu0 0
    %333 = vmatpush2.bf16.msra.mxu0 0
    %334 = vmatprep.mubr.bf16.mxu0 0
    %335 = vmatmul.mubr.bf16.gmra.mxu0 %v193
    %v336 = vpop.f32.mrf.mxu0
    %v337 = vadd.f32 %v215, %v336
    %v338 = vpop.f32.mrf.mxu0
    %v339 = vadd.f32 %v219, %v338
    %v340 = vpop.f32.mrf.mxu0
    %v341 = vpop.f32.mrf.mxu0
    %342 = vdwg.mxu0
    %v343 = vmax.f32 %v337, 0.0
    %v344 = vmax.f32 %v339, 0.0
    %v345 = vpack.c.bf16 %v343, %v343
    %v346 = vpack.c.bf16 %v344, %v344
    %v347 = vld [vmem:[%s7] sm:$0xf]
    %v348 = vld [vmem:[%s7 + $0x4] sm:$0xf]
    %v349 = vld [vmem:[%s7 + $0x8] sm:$0xf]
    %v350 = vld [vmem:[%s7 + $0xc] sm:$0xf]
    %v351 = vld [vmem:[%s7 + $0x10] sm:$0xf]
    %v352 = vld [vmem:[%s7 + $0x14] sm:$0xf]
    %v353 = vld [vmem:[%s7 + $0x18] sm:$0xf]
    %v354 = vld [vmem:[%s7 + $0x1c] sm:$0xf]
    %v355 = vld [vmem:[%s7 + $0x20] sm:$0xf]
    %v356 = vld [vmem:[%s7 + $0x24] sm:$0xf]
    %v357 = vld [vmem:[%s7 + $0x28] sm:$0xf]
    %v358 = vld [vmem:[%s7 + $0x2c] sm:$0xf]
    %v359 = vld [vmem:[%s7 + $0x30] sm:$0xf]
    %v360 = vld [vmem:[%s7 + $0x34] sm:$0xf]
    %v361 = vld [vmem:[%s7 + $0x38] sm:$0xf]
    %v362 = vld [vmem:[%s7 + $0x3c] sm:$0xf]
    %v363 = vld [vmem:[%s7 + $0x40] sm:$0xf]
    %v364 = vld [vmem:[%s7 + $0x44] sm:$0xf]
    %v365 = vld [vmem:[%s7 + $0x48] sm:$0xf]
    %v366 = vld [vmem:[%s7 + $0x4c] sm:$0xf]
    %v367 = vld [vmem:[%s7 + $0x50] sm:$0xf]
    %v368 = vld [vmem:[%s7 + $0x54] sm:$0xf]
    %v369 = vld [vmem:[%s7 + $0x58] sm:$0xf]
    %v370 = vld [vmem:[%s7 + $0x5c] sm:$0xf]
    %v371 = vld [vmem:[%s7 + $0x60] sm:$0xf]
    %v372 = vld [vmem:[%s7 + $0x64] sm:$0xf]
    %v373 = vld [vmem:[%s7 + $0x68] sm:$0xf]
    %v374 = vld [vmem:[%s7 + $0x6c] sm:$0xf]
    %v375 = vld [vmem:[%s7 + $0x70] sm:$0xf]
    %v376 = vld [vmem:[%s7 + $0x74] sm:$0xf]
    %v377 = vld [vmem:[%s7 + $0x78] sm:$0xf]
    %v378 = vld [vmem:[%s7 + $0x7c] sm:$0xf]
    %v379 = vld [vmem:[%s8] sm:$0x1]
    %v381 = vlaneseq
    %v382 = vshrl.u32 %v381, 7
    %v383 = vsub.s32 0, %v382
    %v384 = vrot.slane %v379, %v383
    %v418 = vunpack.c.l.b16 %v347
    %v419 = vunpack.c.l.b16 %v348
    %v420 = vunpack.c.l.b16 %v349
    %v421 = vunpack.c.l.b16 %v350
    %v422 = vunpack.c.l.b16 %v351
    %v423 = vunpack.c.l.b16 %v352
    %v424 = vunpack.c.l.b16 %v353
    %v425 = vunpack.c.l.b16 %v354
    %v426 = vunpack.c.l.b16 %v355
    %v427 = vunpack.c.l.b16 %v356
    %v428 = vunpack.c.l.b16 %v357
    %v429 = vunpack.c.l.b16 %v358
    %v430 = vunpack.c.l.b16 %v359
    %v431 = vunpack.c.l.b16 %v360
    %v432 = vunpack.c.l.b16 %v361
    %v433 = vunpack.c.l.b16 %v362
    %v434 = vunpack.c.l.b16 %v363
    %v435 = vunpack.c.l.b16 %v364
    %v436 = vunpack.c.l.b16 %v365
    %v437 = vunpack.c.l.b16 %v366
    %v438 = vunpack.c.l.b16 %v367
    %v439 = vunpack.c.l.b16 %v368
    %v440 = vunpack.c.l.b16 %v369
    %v441 = vunpack.c.l.b16 %v370
    %v442 = vunpack.c.l.b16 %v371
    %v443 = vunpack.c.l.b16 %v372
    %v444 = vunpack.c.l.b16 %v373
    %v445 = vunpack.c.l.b16 %v374
    %v446 = vunpack.c.l.b16 %v375
    %v447 = vunpack.c.l.b16 %v376
    %v448 = vunpack.c.l.b16 %v377
    %v449 = vunpack.c.l.b16 %v378
    %v450 = vpack.c.b16 %v419, %v418
    %v451 = vpack.c.b16 %v421, %v420
    %v452 = vpack.c.b16 %v423, %v422
    %v453 = vpack.c.b16 %v425, %v424
    %v454 = vpack.c.b16 %v427, %v426
    %v455 = vpack.c.b16 %v429, %v428
    %v456 = vpack.c.b16 %v431, %v430
    %v457 = vpack.c.b16 %v433, %v432
    %v458 = vpack.c.b16 %v435, %v434
    %v459 = vpack.c.b16 %v437, %v436
    %v460 = vpack.c.b16 %v439, %v438
    %v461 = vpack.c.b16 %v441, %v440
    %v462 = vpack.c.b16 %v443, %v442
    %v463 = vpack.c.b16 %v445, %v444
    %v464 = vpack.c.b16 %v447, %v446
    %v465 = vpack.c.b16 %v449, %v448
    %482 = vmatprep.subr.bf16.mxu0 0
    %483 = vmatpush1.bf16.msra.mxu0 %v457
    %484 = vmatprep.subr.bf16.mxu0 0
    %485 = vmatpush1.bf16.msra.mxu0 %v456
    %486 = vmatprep.subr.bf16.mxu0 0
    %487 = vmatpush1.bf16.msra.mxu0 %v455
    %488 = vmatprep.subr.bf16.mxu0 0
    %489 = vmatpush1.bf16.msra.mxu0 %v454
    %490 = vmatprep.subr.bf16.mxu0 0
    %491 = vmatpush1.bf16.msra.mxu0 %v453
    %492 = vmatprep.subr.bf16.mxu0 0
    %493 = vmatpush1.bf16.msra.mxu0 %v452
    %494 = vmatprep.subr.bf16.mxu0 0
    %495 = vmatpush1.bf16.msra.mxu0 %v451
    %496 = vmatprep.subr.bf16.mxu0 0
    %497 = vmatpush1.bf16.msra.mxu0 %v450
    %498 = vmatprep.subr.bf16.mxu0 0
    %499 = vmatpush2.bf16.msra.mxu0 %v465
    %500 = vmatprep.subr.bf16.mxu0 0
    %501 = vmatpush2.bf16.msra.mxu0 %v464
    %502 = vmatprep.subr.bf16.mxu0 0
    %503 = vmatpush2.bf16.msra.mxu0 %v463
    %504 = vmatprep.subr.bf16.mxu0 0
    %505 = vmatpush2.bf16.msra.mxu0 %v462
    %506 = vmatprep.subr.bf16.mxu0 0
    %507 = vmatpush2.bf16.msra.mxu0 %v461
    %508 = vmatprep.subr.bf16.mxu0 0
    %509 = vmatpush2.bf16.msra.mxu0 %v460
    %510 = vmatprep.subr.bf16.mxu0 0
    %511 = vmatpush2.bf16.msra.mxu0 %v459
    %512 = vmatprep.subr.bf16.mxu0 0
    %513 = vmatpush2.bf16.msra.mxu0 %v458
    %514 = vmatprep.mubr.bf16.mxu0 %v346
    %515 = vmatmul.mubr.bf16.gmra.mxu0 %v345
    %v516 = vpop.f32.mrf.mxu0
    %v517 = vadd.f32 %v384, %v516
    %v518 = vpop.f32.mrf.mxu0
    %v519 = vpop.f32.mrf.mxu0
    %v520 = vpop.f32.mrf.mxu0
    %521 = vdwg.mxu0
    %vm522 = vcmask 64512
    %v523 = vsel %vm522, %v517, -inf
    %524 = vmax.xlane.f32.xlu0 %v523
    %v525 = vpop.xlane.xlu0 %524
    %v526 = vsub.f32 %v517, %v525
    %v527 = vmul.f32 %v526, 1.442695
    %v528 = vpow.pop %v527
    %v529 = vsel %vm522, %v528, 0.0
    %530 = vadd.xlane.f32.xlu0 %v529
    %v531 = vpop.xlane.xlu0 %530
    %v532 = vrcp.pop %v531
    %v533 = vmul.f32 %v528, %v532
    %534 = vst.msk [vmem:[#allocation7] sm:$0xff] %vm522, %v533
    %535 = vst.msk [vmem:[#allocation8] sm:$0xff] %vm82, %v131
    // Predicated region
    $region46: #{tpu_custom_call.1} parent=1 // pred_check
      _
    $region47: #{tpu_custom_call.1} parent=1 // pred_check_branch
      %537 = sbr.rel (0) target = $region49
    $region48: #{tpu_custom_call.1} parent=1 // pred_region
      %s539 = ssub.s32 128, 128
      %540 = vsyncadd [#allocation4], %s539
      %s542 = sshll.u32 [#allocation7], 4
      %s543 = int_to_ptr.vmem [resolvable:$true] %s542
      %545 = dma.vmem_to_hbm [thread:$0]  %s543, 128, %s9, [#allocation4]
    $region49: #{tpu_custom_call.1} parent=1 // pred_fallthru
      _
    // Predicated region
    $region50: #{tpu_custom_call.1} parent=1 // pred_check
      _
    $region51: #{tpu_custom_call.1} parent=1 // pred_check_branch
      %547 = sbr.rel (0) target = $region53
    $region52: #{tpu_custom_call.1} parent=1 // pred_region
      %s549 = ssub.s32 128, 128
      %550 = vsyncadd [#allocation9], %s549
      %s552 = sshll.u32 [#allocation8], 4
      %s553 = int_to_ptr.vmem [resolvable:$true] %s552
      %555 = dma.vmem_to_hbm [thread:$0]  %s553, 128, %s10, [#allocation9]
    $region53: #{tpu_custom_call.1} parent=1 // pred_fallthru
      _
    // Predicated region
    $region54: #{tpu_custom_call.1} parent=1 // pred_check
      _
    $region55: #{tpu_custom_call.1} parent=1 // pred_check_branch
      %557 = sbr.rel (0) target = $region57
    $region56: #{tpu_custom_call.1} parent=1 // pred_region
      %558 = dma.done [#allocation4], 128
    $region57: #{tpu_custom_call.1} parent=1 // pred_fallthru
      _
    // Predicated region
    $region58: #{tpu_custom_call.1} parent=1 // pred_check
      _
    $region59: #{tpu_custom_call.1} parent=1 // pred_check_branch
      %560 = sbr.rel (0) target = $region61
    $region60: #{tpu_custom_call.1} parent=1 // pred_region
      %561 = dma.done [#allocation9], 128
    $region61: #{tpu_custom_call.1} parent=1 // pred_fallthru
      _
    %562 = vsyncpa [#allocation3], 1
    %563 = vsyncpa [#allocation6], 1
    %564 = vsyncpa [#allocation4], 1
    %565 = vsyncpa [#allocation9], 1

</llo_original>
